<compile_context>
chip_gen: v6e
topology: v6e:2x2x1
jax: 0.10.0
libtpu: 0.0.40
codegen_flags: <defaults>
</compile_context>

<pallas_src>
import numpy as np
import jax
import jax.numpy as jnp
from jax import lax
from jax.experimental import pallas as pl
from jax.experimental.pallas import tpu as pltpu

# ------------------------- configuration -------------------------
BATCH = 2
INPLANES = 16
PLANES = 4
H = W = 8
RADIX = 2
CARDINALITY = 1
BASE_WIDTH = 64
GROUP_WIDTH = int(PLANES * (BASE_WIDTH / 64.0)) * CARDINALITY      # 4
MID_CHS = GROUP_WIDTH * RADIX                                      # 8
OUT_CHS = PLANES * 4                                               # 16
BN_EPS = 1e-5

M_ROWS = BATCH * H * W                                             # 128 -> lane axis
GROUPS = RADIX * CARDINALITY                                       # 2
CIN_G = GROUP_WIDTH // GROUPS                                      # 2
COUT_G = MID_CHS // GROUPS                                         # 4

assert CARDINALITY == 1, "fused kernel below assumes cardinality == 1"


def make_divisible(v, divisor=8, min_value=None, round_limit=0.9):
    min_value = min_value or divisor
    new_v = max(min_value, int(v + divisor / 2) // divisor * divisor)
    if new_v < round_limit * v:
        new_v += divisor
    return new_v


ATTN_CHS = make_divisible(GROUP_WIDTH * RADIX * 0.25, min_value=32, divisor=8)  # 32


# ------------------------- trace-time constant tables -------------------------
def build_constants():
    """Segment matrices + conv-tap boundary masks, built once on the host."""
    m = np.arange(M_ROWS)
    b_of_m = m // (H * W)
    h_of_m = (m // W) % H
    w_of_m = m % W
    # (M, B): averages each image's H*W lanes -> per-image GAP via one matmul
    seg_mb = (b_of_m[:, None] == np.arange(BATCH)[None, :]).astype(np.float32)
    seg_mb /= float(H * W)
    # (B, M): 0/1 broadcast of per-image attention back onto that image's lanes
    seg_bm = (np.arange(BATCH)[:, None] == b_of_m[None, :]).astype(np.float32)
    # (9, M): validity of each 3x3 tap at each output position (SAME padding)
    masks = np.zeros((9, M_ROWS), np.float32)
    t = 0
    for kh in range(3):
        for kw in range(3):
            dh, dw = kh - 1, kw - 1
            valid = ((h_of_m + dh >= 0) & (h_of_m + dh < H) &
                     (w_of_m + dw >= 0) & (w_of_m + dw < W))
            masks[t] = valid.astype(np.float32)
            t += 1
    return jnp.asarray(seg_mb), jnp.asarray(seg_bm), jnp.asarray(masks)


# ------------------------- fused Pallas kernel -------------------------
def _lane_shift(x, s, size):
    """result[:, m] = x[:, (m + s) % size]  (s is a static Python int)."""
    k = s % size
    if k == 0:
        return x
    return jnp.concatenate([x[:, k:], x[:, :k]], axis=1)


def fused_bottleneck_kernel(xT_ref, w1_ref, b1_ref, w2_ref, b2_ref,
                            wfc1_ref, bfc1_ref, wfc2_ref, bfc2_ref,
                            w3_ref, b3_ref, seg_mb_ref, seg_bm_ref, mask_ref,
                            o_ref):
    f32 = jnp.float32
    xT = xT_ref[...]                                                  # (INPLANES, M)

    # ---- conv1 (1x1) + bn1 + relu :  (GW, Cin) @ (Cin, M) ----
    y1 = jnp.dot(w1_ref[...], xT, preferred_element_type=f32) + b1_ref[...]
    y1 = jnp.maximum(y1, 0.0)                                         # (GW, M)

    # ---- SplitAttn grouped 3x3 conv + bn0 + relu (in-kernel im2col) ----
    masks = mask_ref[...]                                             # (9, M) 0/1
    w2 = w2_ref[...]                                                  # (MID, 9*CIN_G)
    b2 = b2_ref[...]                                                  # (MID, 1)
    parts = [[] for _ in range(GROUPS)]
    t = 0
    for kh in range(3):
        for kw in range(3):
            s = (kh - 1) * W + (kw - 1)          # lane offset of this conv tap
            shifted = _lane_shift(y1, s, M_ROWS) * masks[t:t + 1, :]  # (GW, M)
            for g in range(GROUPS):
                parts[g].append(shifted[g * CIN_G:(g + 1) * CIN_G, :])
            t += 1
    y2_groups = []
    for g in range(GROUPS):                      # group g == radix r (cardinality=1)
        patches = jnp.concatenate(parts[g], axis=0)                   # (9*CIN_G, M)
        yg = jnp.dot(w2[g * COUT_G:(g + 1) * COUT_G, :], patches,
                     preferred_element_type=f32)
        yg = yg + b2[g * COUT_G:(g + 1) * COUT_G, :]
        y2_groups.append(jnp.maximum(yg, 0.0))                        # (COUT_G, M)

    # ---- radix sum + per-image global average pool (segment matmul) ----
    rsum = y2_groups[0]
    for r in range(1, RADIX):
        rsum = rsum + y2_groups[r]                                    # (GW, M)
    gap = jnp.dot(rsum, seg_mb_ref[...], preferred_element_type=f32)  # (GW, B)

    # ---- fc1 + bn1 + relu, then fc2 ----
    a = jnp.dot(wfc1_ref[...], gap, preferred_element_type=f32) + bfc1_ref[...]
    a = jnp.maximum(a, 0.0)                                           # (ATTN, B)
    logits = (jnp.dot(wfc2_ref[...], a, preferred_element_type=f32)
              + bfc2_ref[...])                                        # (MID, B)

    # ---- radix softmax over the radix channel halves ----
    if RADIX > 1:
        lg = [logits[r * GROUP_WIDTH:(r + 1) * GROUP_WIDTH, :] for r in range(RADIX)]
        mx = lg[0]
        for r in range(1, RADIX):
            mx = jnp.maximum(mx, lg[r])
        es = [jnp.exp(l - mx) for l in lg]                            # EUP
        denom = es[0]
        for r in range(1, RADIX):
            denom = denom + es[r]
        inv = pl.reciprocal(denom, approx=False)
        probs = [e * inv for e in es]                                 # each (GW, B)
    else:
        probs = [jax.nn.sigmoid(logits)]

    # ---- broadcast attn over each image's lanes + weighted radix sum ----
    seg_bm = seg_bm_ref[...]                                          # (B, M) 0/1
    out2 = None
    for r, p_r in enumerate(probs):
        attn_full = jnp.dot(p_r, seg_bm, preferred_element_type=f32)  # (GW, M)
        term = y2_groups[r] * attn_full
        out2 = term if out2 is None else out2 + term                  # (GW, M)

    # ---- conv3 (1x1) + bn3 + residual + relu (downsample=None) ----
    y3 = jnp.dot(w3_ref[...], out2, preferred_element_type=f32) + b3_ref[...] + xT
    o_ref[...] = jnp.maximum(y3, 0.0)                                 # (OUT, M)


# ------------------------- trace-time parameter prep -------------------------
def fold_bn(bn):
    s = bn["gamma"] / jnp.sqrt(bn["var"] + BN_EPS)
    return s, bn["beta"] - bn["mean"] * s


def prepare_operands(p):
    """Fold BN scales into transposed weights; biases become (C, 1) columns."""
    s1, b1 = fold_bn(p["bn1"])
    w1T = (p["conv1_w"] * s1[None, :]).T.astype(jnp.float32)          # (GW, Cin)
    b1c = b1.reshape(GROUP_WIDTH, 1).astype(jnp.float32)

    s0, b0 = fold_bn(p["bn0"])
    w2_rows = []
    for g in range(GROUPS):
        wg = p["conv2_w"][g * COUT_G:(g + 1) * COUT_G]                # (COUT_G, CIN_G, 3, 3)
        wg = jnp.transpose(wg, (0, 2, 3, 1)).reshape(COUT_G, 9 * CIN_G)
        w2_rows.append(wg * s0[g * COUT_G:(g + 1) * COUT_G, None])
    w2T = jnp.concatenate(w2_rows, axis=0).astype(jnp.float32)        # (MID, 9*CIN_G)
    b2c = b0.reshape(MID_CHS, 1).astype(jnp.float32)

    sA, bA = fold_bn(p["bn1s"])
    wfc1T = (p["fc1_w"] * sA[None, :]).T.astype(jnp.float32)          # (ATTN, GW)
    bfc1c = (p["fc1_b"] * sA + bA).reshape(ATTN_CHS, 1).astype(jnp.float32)

    wfc2T = p["fc2_w"].T.astype(jnp.float32)                          # (MID, ATTN)
    bfc2c = p["fc2_b"].reshape(MID_CHS, 1).astype(jnp.float32)

    s3, b3 = fold_bn(p["bn3"])
    w3T = (p["conv3_w"] * s3[None, :]).T.astype(jnp.float32)          # (OUT, GW)
    b3c = b3.reshape(OUT_CHS, 1).astype(jnp.float32)
    return (w1T, b1c, w2T, b2c, wfc1T, bfc1c, wfc2T, bfc2c, w3T, b3c)


# ------------------------- forward pass (single pallas_call) -------------------------
def pallas_forward(x_nhwc, p):
    B, Hh, Ww, Cin = x_nhwc.shape
    m = B * Hh * Ww
    xT = x_nhwc.reshape(m, Cin).T                                     # (Cin, M) lane-dense
    seg_mb, seg_bm, masks = build_constants()
    args = (xT,) + prepare_operands(p) + (seg_mb, seg_bm, masks)
    in_specs = [pl.BlockSpec(a.shape, lambda i, nd=a.ndim: (0,) * nd) for a in args]
    outT = pl.pallas_call(
        fused_bottleneck_kernel,
        out_shape=jax.ShapeDtypeStruct((OUT_CHS, m), jnp.float32),
        grid=(1,),
        in_specs=in_specs,
        out_specs=pl.BlockSpec((OUT_CHS, m), lambda i: (0, 0)),
        compiler_params=pltpu.CompilerParams(
            dimension_semantics=("arbitrary",)),
    )(*args)
    return outT.T.reshape(B, Hh, Ww, OUT_CHS)


# ------------------------- parameter init -------------------------
def init_params(key):
    ks = jax.random.split(key, 11)

    def nrm(k, shape, scale=0.1):
        return scale * jax.random.normal(k, shape, jnp.float32)

    def bn(k, c):
        k1, k2, k3, k4 = jax.random.split(k, 4)
        return dict(
            gamma=1.0 + nrm(k1, (c,)),
            beta=nrm(k2, (c,)),
            mean=nrm(k3, (c,)),
            var=1.0 + 0.1 * jnp.abs(jax.random.normal(k4, (c,), jnp.float32)),
        )

    return {
        "conv1_w": nrm(ks[0], (INPLANES, GROUP_WIDTH)),            # 1x1, stored (Cin, Cout)
        "bn1": bn(ks[1], GROUP_WIDTH),
        "conv2_w": nrm(ks[2], (MID_CHS, CIN_G, 3, 3)),             # torch layout (O, I/g, kh, kw)
        "bn0": bn(ks[3], MID_CHS),
        "fc1_w": nrm(ks[4], (GROUP_WIDTH, ATTN_CHS)),
        "fc1_b": nrm(ks[5], (ATTN_CHS,)),
        "bn1s": bn(ks[6], ATTN_CHS),
        "fc2_w": nrm(ks[7], (ATTN_CHS, MID_CHS)),
        "fc2_b": nrm(ks[8], (MID_CHS,)),
        "conv3_w": nrm(ks[9], (GROUP_WIDTH, OUT_CHS)),
        "bn3": bn(ks[10], OUT_CHS),
    }


# ------------------------- pure-JAX reference -------------------------
def ref_forward(x_nhwc, p):
    s1, b1 = fold_bn(p["bn1"])
    y = jnp.einsum("bhwc,co->bhwo", x_nhwc, p["conv1_w"])
    y = jnp.maximum(y * s1 + b1, 0.0)

    w_hwio = jnp.transpose(p["conv2_w"], (2, 3, 1, 0))
    y2 = lax.conv_general_dilated(
        y, w_hwio, (1, 1), "SAME",
        dimension_numbers=("NHWC", "HWIO", "NHWC"),
        feature_group_count=RADIX * CARDINALITY)
    s0, b0 = fold_bn(p["bn0"])
    y2 = jnp.maximum(y2 * s0 + b0, 0.0)

    xs = y2.reshape(BATCH, H, W, RADIX, GROUP_WIDTH)
    gap = xs.sum(axis=3).mean(axis=(1, 2))                        # (B, GW)
    sA, bA = fold_bn(p["bn1s"])
    a = jnp.maximum((gap @ p["fc1_w"] + p["fc1_b"]) * sA + bA, 0.0)
    logits = a @ p["fc2_w"] + p["fc2_b"]
    attn = jax.nn.softmax(logits.reshape(BATCH, RADIX, GROUP_WIDTH), axis=1)
    out2 = (xs * attn[:, None, None, :, :]).sum(axis=3)           # (B,H,W,GW)

    s3, b3 = fold_bn(p["bn3"])
    y3 = jnp.einsum("bhwc,co->bhwo", out2, p["conv3_w"]) * s3 + b3
    return jnp.maximum(y3 + x_nhwc, 0.0)


# ------------------------- main -------------------------
if __name__ == "__main__":
    key = jax.random.PRNGKey(0)
    kx, kp = jax.random.split(key)
    # PyTorch-convention NCHW input
    x_nchw = jax.random.normal(kx, (BATCH, INPLANES, H, W), jnp.float32)
    params = init_params(kp)

    x_nhwc = jnp.transpose(x_nchw, (0, 2, 3, 1))
    out = jax.jit(pallas_forward)(x_nhwc, params)
    out = jax.block_until_ready(out)

    ref = ref_forward(x_nhwc, params)
    err = float(jnp.max(jnp.abs(out - ref)))
    assert jnp.allclose(out, ref, atol=1e-4, rtol=1e-4), f"max abs err = {err}"
    print("KERNEL_OK")
</pallas_src>

<mosaic_0001>
module attributes {stable_mosaic.version = 11 : i64} {
  func.func @fused_bottleneck_kernel(%arg0: i32, %arg1: memref<16x128xf32, #tpu.memory_space<vmem>>, %arg2: memref<4x16xf32, #tpu.memory_space<vmem>>, %arg3: memref<4x1xf32, #tpu.memory_space<vmem>>, %arg4: memref<8x18xf32, #tpu.memory_space<vmem>>, %arg5: memref<8x1xf32, #tpu.memory_space<vmem>>, %arg6: memref<32x4xf32, #tpu.memory_space<vmem>>, %arg7: memref<32x1xf32, #tpu.memory_space<vmem>>, %arg8: memref<8x32xf32, #tpu.memory_space<vmem>>, %arg9: memref<8x1xf32, #tpu.memory_space<vmem>>, %arg10: memref<16x4xf32, #tpu.memory_space<vmem>>, %arg11: memref<16x1xf32, #tpu.memory_space<vmem>>, %arg12: memref<128x2xf32, #tpu.memory_space<vmem>>, %arg13: memref<2x128xf32, #tpu.memory_space<vmem>>, %arg14: memref<9x128xf32, #tpu.memory_space<vmem>>, %arg15: memref<16x128xf32, #tpu.memory_space<vmem>>) attributes {dimension_semantics = [#tpu.dimension_semantics<arbitrary>], iteration_bounds = array<i64: 1>, scalar_prefetch = 0 : i64, scratch_operands = 0 : i64, tpu.core_type = #tpu.core_type<tc>, window_params = [{pipeline_mode = #tpu.pipeline_mode<synchronous>, transform_indices = @transform_0, window_bounds = array<i64: 16, 128>}, {pipeline_mode = #tpu.pipeline_mode<synchronous>, transform_indices = @transform_1, window_bounds = array<i64: 4, 16>}, {pipeline_mode = #tpu.pipeline_mode<synchronous>, transform_indices = @transform_2, window_bounds = array<i64: 4, 1>}, {pipeline_mode = #tpu.pipeline_mode<synchronous>, transform_indices = @transform_3, window_bounds = array<i64: 8, 18>}, {pipeline_mode = #tpu.pipeline_mode<synchronous>, transform_indices = @transform_4, window_bounds = array<i64: 8, 1>}, {pipeline_mode = #tpu.pipeline_mode<synchronous>, transform_indices = @transform_5, window_bounds = array<i64: 32, 4>}, {pipeline_mode = #tpu.pipeline_mode<synchronous>, transform_indices = @transform_6, window_bounds = array<i64: 32, 1>}, {pipeline_mode = #tpu.pipeline_mode<synchronous>, transform_indices = @transform_7, window_bounds = array<i64: 8, 32>}, {pipeline_mode = #tpu.pipeline_mode<synchronous>, transform_indices = @transform_8, window_bounds = array<i64: 8, 1>}, {pipeline_mode = #tpu.pipeline_mode<synchronous>, transform_indices = @transform_9, window_bounds = array<i64: 16, 4>}, {pipeline_mode = #tpu.pipeline_mode<synchronous>, transform_indices = @transform_10, window_bounds = array<i64: 16, 1>}, {pipeline_mode = #tpu.pipeline_mode<synchronous>, transform_indices = @transform_11, window_bounds = array<i64: 128, 2>}, {pipeline_mode = #tpu.pipeline_mode<synchronous>, transform_indices = @transform_12, window_bounds = array<i64: 2, 128>}, {pipeline_mode = #tpu.pipeline_mode<synchronous>, transform_indices = @transform_13, window_bounds = array<i64: 9, 128>}, {pipeline_mode = #tpu.pipeline_mode<synchronous>, transform_indices = @transform_14, window_bounds = array<i64: 16, 128>}]} {
    %c0 = arith.constant 0 : index
    %c0_0 = arith.constant 0 : index
    %0 = vector.load %arg1[%c0, %c0_0] : memref<16x128xf32, #tpu.memory_space<vmem>>, vector<16x128xf32>
    %c0_1 = arith.constant 0 : index
    %c0_2 = arith.constant 0 : index
    %1 = vector.load %arg2[%c0_1, %c0_2] : memref<4x16xf32, #tpu.memory_space<vmem>>, vector<4x16xf32>
    %cst = arith.constant dense<0.000000e+00> : vector<4x128xf32>
    %2 = tpu.matmul %1, %0, %cst {dimension_numbers = #tpu.dot_dimension_numbers<[1], [0], [0], [1], [0, 0, 1, 1], [], []>} : vector<4x16xf32>, vector<16x128xf32>, vector<4x128xf32> -> vector<4x128xf32>
    %c0_3 = arith.constant 0 : index
    %c0_4 = arith.constant 0 : index
    %3 = vector.load %arg3[%c0_3, %c0_4] : memref<4x1xf32, #tpu.memory_space<vmem>>, vector<4x1xf32>
    %4 = vector.broadcast %3 : vector<4x1xf32> to vector<4x128xf32>
    %5 = arith.addf %2, %4 : vector<4x128xf32>
    %cst_5 = arith.constant 0.000000e+00 : f32
    %6 = vector.broadcast %cst_5 : f32 to vector<4x128xf32>
    %7 = arith.maximumf %5, %6 : vector<4x128xf32>
    %c0_6 = arith.constant 0 : index
    %c0_7 = arith.constant 0 : index
    %8 = vector.load %arg14[%c0_6, %c0_7] : memref<9x128xf32, #tpu.memory_space<vmem>>, vector<9x128xf32>
    %c0_8 = arith.constant 0 : index
    %c0_9 = arith.constant 0 : index
    %9 = vector.load %arg4[%c0_8, %c0_9] : memref<8x18xf32, #tpu.memory_space<vmem>>, vector<8x18xf32>
    %c0_10 = arith.constant 0 : index
    %c0_11 = arith.constant 0 : index
    %10 = vector.load %arg5[%c0_10, %c0_11] : memref<8x1xf32, #tpu.memory_space<vmem>>, vector<8x1xf32>
    %11 = vector.extract_strided_slice %7 {offsets = [0, 119], sizes = [4, 9], strides = [1, 1]} : vector<4x128xf32> to vector<4x9xf32>
    %12 = vector.extract_strided_slice %7 {offsets = [0, 0], sizes = [4, 119], strides = [1, 1]} : vector<4x128xf32> to vector<4x119xf32>
    %13 = tpu.concatenate %11, %12 in 1 : vector<4x9xf32>, vector<4x119xf32> -> vector<4x128xf32>
    %14 = vector.extract_strided_slice %8 {offsets = [0, 0], sizes = [1, 128], strides = [1, 1]} : vector<9x128xf32> to vector<1x128xf32>
    %15 = vector.broadcast %14 : vector<1x128xf32> to vector<4x128xf32>
    %16 = arith.mulf %13, %15 : vector<4x128xf32>
    %17 = vector.extract_strided_slice %16 {offsets = [0, 0], sizes = [2, 128], strides = [1, 1]} : vector<4x128xf32> to vector<2x128xf32>
    %18 = vector.extract_strided_slice %16 {offsets = [2, 0], sizes = [2, 128], strides = [1, 1]} : vector<4x128xf32> to vector<2x128xf32>
    %19 = vector.extract_strided_slice %7 {offsets = [0, 120], sizes = [4, 8], strides = [1, 1]} : vector<4x128xf32> to vector<4x8xf32>
    %20 = vector.extract_strided_slice %7 {offsets = [0, 0], sizes = [4, 120], strides = [1, 1]} : vector<4x128xf32> to vector<4x120xf32>
    %21 = tpu.concatenate %19, %20 in 1 : vector<4x8xf32>, vector<4x120xf32> -> vector<4x128xf32>
    %22 = vector.extract_strided_slice %8 {offsets = [1, 0], sizes = [1, 128], strides = [1, 1]} : vector<9x128xf32> to vector<1x128xf32>
    %23 = vector.broadcast %22 : vector<1x128xf32> to vector<4x128xf32>
    %24 = arith.mulf %21, %23 : vector<4x128xf32>
    %25 = vector.extract_strided_slice %24 {offsets = [0, 0], sizes = [2, 128], strides = [1, 1]} : vector<4x128xf32> to vector<2x128xf32>
    %26 = vector.extract_strided_slice %24 {offsets = [2, 0], sizes = [2, 128], strides = [1, 1]} : vector<4x128xf32> to vector<2x128xf32>
    %27 = vector.extract_strided_slice %7 {offsets = [0, 121], sizes = [4, 7], strides = [1, 1]} : vector<4x128xf32> to vector<4x7xf32>
    %28 = vector.extract_strided_slice %7 {offsets = [0, 0], sizes = [4, 121], strides = [1, 1]} : vector<4x128xf32> to vector<4x121xf32>
    %29 = tpu.concatenate %27, %28 in 1 : vector<4x7xf32>, vector<4x121xf32> -> vector<4x128xf32>
    %30 = vector.extract_strided_slice %8 {offsets = [2, 0], sizes = [1, 128], strides = [1, 1]} : vector<9x128xf32> to vector<1x128xf32>
    %31 = vector.broadcast %30 : vector<1x128xf32> to vector<4x128xf32>
    %32 = arith.mulf %29, %31 : vector<4x128xf32>
    %33 = vector.extract_strided_slice %32 {offsets = [0, 0], sizes = [2, 128], strides = [1, 1]} : vector<4x128xf32> to vector<2x128xf32>
    %34 = vector.extract_strided_slice %32 {offsets = [2, 0], sizes = [2, 128], strides = [1, 1]} : vector<4x128xf32> to vector<2x128xf32>
    %35 = vector.extract_strided_slice %7 {offsets = [0, 127], sizes = [4, 1], strides = [1, 1]} : vector<4x128xf32> to vector<4x1xf32>
    %36 = vector.extract_strided_slice %7 {offsets = [0, 0], sizes = [4, 127], strides = [1, 1]} : vector<4x128xf32> to vector<4x127xf32>
    %37 = tpu.concatenate %35, %36 in 1 : vector<4x1xf32>, vector<4x127xf32> -> vector<4x128xf32>
    %38 = vector.extract_strided_slice %8 {offsets = [3, 0], sizes = [1, 128], strides = [1, 1]} : vector<9x128xf32> to vector<1x128xf32>
    %39 = vector.broadcast %38 : vector<1x128xf32> to vector<4x128xf32>
    %40 = arith.mulf %37, %39 : vector<4x128xf32>
    %41 = vector.extract_strided_slice %40 {offsets = [0, 0], sizes = [2, 128], strides = [1, 1]} : vector<4x128xf32> to vector<2x128xf32>
    %42 = vector.extract_strided_slice %40 {offsets = [2, 0], sizes = [2, 128], strides = [1, 1]} : vector<4x128xf32> to vector<2x128xf32>
    %43 = vector.extract_strided_slice %8 {offsets = [4, 0], sizes = [1, 128], strides = [1, 1]} : vector<9x128xf32> to vector<1x128xf32>
    %44 = vector.broadcast %43 : vector<1x128xf32> to vector<4x128xf32>
    %45 = arith.mulf %7, %44 : vector<4x128xf32>
    %46 = vector.extract_strided_slice %45 {offsets = [0, 0], sizes = [2, 128], strides = [1, 1]} : vector<4x128xf32> to vector<2x128xf32>
    %47 = vector.extract_strided_slice %45 {offsets = [2, 0], sizes = [2, 128], strides = [1, 1]} : vector<4x128xf32> to vector<2x128xf32>
    %48 = vector.extract_strided_slice %7 {offsets = [0, 1], sizes = [4, 127], strides = [1, 1]} : vector<4x128xf32> to vector<4x127xf32>
    %49 = vector.extract_strided_slice %7 {offsets = [0, 0], sizes = [4, 1], strides = [1, 1]} : vector<4x128xf32> to vector<4x1xf32>
    %50 = tpu.concatenate %48, %49 in 1 : vector<4x127xf32>, vector<4x1xf32> -> vector<4x128xf32>
    %51 = vector.extract_strided_slice %8 {offsets = [5, 0], sizes = [1, 128], strides = [1, 1]} : vector<9x128xf32> to vector<1x128xf32>
    %52 = vector.broadcast %51 : vector<1x128xf32> to vector<4x128xf32>
    %53 = arith.mulf %50, %52 : vector<4x128xf32>
    %54 = vector.extract_strided_slice %53 {offsets = [0, 0], sizes = [2, 128], strides = [1, 1]} : vector<4x128xf32> to vector<2x128xf32>
    %55 = vector.extract_strided_slice %53 {offsets = [2, 0], sizes = [2, 128], strides = [1, 1]} : vector<4x128xf32> to vector<2x128xf32>
    %56 = vector.extract_strided_slice %7 {offsets = [0, 7], sizes = [4, 121], strides = [1, 1]} : vector<4x128xf32> to vector<4x121xf32>
    %57 = vector.extract_strided_slice %7 {offsets = [0, 0], sizes = [4, 7], strides = [1, 1]} : vector<4x128xf32> to vector<4x7xf32>
    %58 = tpu.concatenate %56, %57 in 1 : vector<4x121xf32>, vector<4x7xf32> -> vector<4x128xf32>
    %59 = vector.extract_strided_slice %8 {offsets = [6, 0], sizes = [1, 128], strides = [1, 1]} : vector<9x128xf32> to vector<1x128xf32>
    %60 = vector.broadcast %59 : vector<1x128xf32> to vector<4x128xf32>
    %61 = arith.mulf %58, %60 : vector<4x128xf32>
    %62 = vector.extract_strided_slice %61 {offsets = [0, 0], sizes = [2, 128], strides = [1, 1]} : vector<4x128xf32> to vector<2x128xf32>
    %63 = vector.extract_strided_slice %61 {offsets = [2, 0], sizes = [2, 128], strides = [1, 1]} : vector<4x128xf32> to vector<2x128xf32>
    %64 = vector.extract_strided_slice %7 {offsets = [0, 8], sizes = [4, 120], strides = [1, 1]} : vector<4x128xf32> to vector<4x120xf32>
    %65 = vector.extract_strided_slice %7 {offsets = [0, 0], sizes = [4, 8], strides = [1, 1]} : vector<4x128xf32> to vector<4x8xf32>
    %66 = tpu.concatenate %64, %65 in 1 : vector<4x120xf32>, vector<4x8xf32> -> vector<4x128xf32>
    %67 = vector.extract_strided_slice %8 {offsets = [7, 0], sizes = [1, 128], strides = [1, 1]} : vector<9x128xf32> to vector<1x128xf32>
    %68 = vector.broadcast %67 : vector<1x128xf32> to vector<4x128xf32>
    %69 = arith.mulf %66, %68 : vector<4x128xf32>
    %70 = vector.extract_strided_slice %69 {offsets = [0, 0], sizes = [2, 128], strides = [1, 1]} : vector<4x128xf32> to vector<2x128xf32>
    %71 = vector.extract_strided_slice %69 {offsets = [2, 0], sizes = [2, 128], strides = [1, 1]} : vector<4x128xf32> to vector<2x128xf32>
    %72 = vector.extract_strided_slice %7 {offsets = [0, 9], sizes = [4, 119], strides = [1, 1]} : vector<4x128xf32> to vector<4x119xf32>
    %73 = vector.extract_strided_slice %7 {offsets = [0, 0], sizes = [4, 9], strides = [1, 1]} : vector<4x128xf32> to vector<4x9xf32>
    %74 = tpu.concatenate %72, %73 in 1 : vector<4x119xf32>, vector<4x9xf32> -> vector<4x128xf32>
    %75 = vector.extract_strided_slice %8 {offsets = [8, 0], sizes = [1, 128], strides = [1, 1]} : vector<9x128xf32> to vector<1x128xf32>
    %76 = vector.broadcast %75 : vector<1x128xf32> to vector<4x128xf32>
    %77 = arith.mulf %74, %76 : vector<4x128xf32>
    %78 = vector.extract_strided_slice %77 {offsets = [0, 0], sizes = [2, 128], strides = [1, 1]} : vector<4x128xf32> to vector<2x128xf32>
    %79 = vector.extract_strided_slice %77 {offsets = [2, 0], sizes = [2, 128], strides = [1, 1]} : vector<4x128xf32> to vector<2x128xf32>
    %80 = tpu.concatenate %17, %25, %33, %41, %46, %54, %62, %70, %78 in 0 : vector<2x128xf32>, vector<2x128xf32>, vector<2x128xf32>, vector<2x128xf32>, vector<2x128xf32>, vector<2x128xf32>, vector<2x128xf32>, vector<2x128xf32>, vector<2x128xf32> -> vector<18x128xf32>
    %81 = vector.extract_strided_slice %9 {offsets = [0, 0], sizes = [4, 18], strides = [1, 1]} : vector<8x18xf32> to vector<4x18xf32>
    %cst_12 = arith.constant dense<0.000000e+00> : vector<4x128xf32>
    %82 = tpu.matmul %81, %80, %cst_12 {dimension_numbers = #tpu.dot_dimension_numbers<[1], [0], [0], [1], [0, 0, 1, 1], [], []>} : vector<4x18xf32>, vector<18x128xf32>, vector<4x128xf32> -> vector<4x128xf32>
    %83 = vector.extract_strided_slice %10 {offsets = [0, 0], sizes = [4, 1], strides = [1, 1]} : vector<8x1xf32> to vector<4x1xf32>
    %84 = vector.broadcast %83 : vector<4x1xf32> to vector<4x128xf32>
    %85 = arith.addf %82, %84 : vector<4x128xf32>
    %cst_13 = arith.constant 0.000000e+00 : f32
    %86 = vector.broadcast %cst_13 : f32 to vector<4x128xf32>
    %87 = arith.maximumf %85, %86 : vector<4x128xf32>
    %88 = tpu.concatenate %18, %26, %34, %42, %47, %55, %63, %71, %79 in 0 : vector<2x128xf32>, vector<2x128xf32>, vector<2x128xf32>, vector<2x128xf32>, vector<2x128xf32>, vector<2x128xf32>, vector<2x128xf32>, vector<2x128xf32>, vector<2x128xf32> -> vector<18x128xf32>
    %89 = vector.extract_strided_slice %9 {offsets = [4, 0], sizes = [4, 18], strides = [1, 1]} : vector<8x18xf32> to vector<4x18xf32>
    %cst_14 = arith.constant dense<0.000000e+00> : vector<4x128xf32>
    %90 = tpu.matmul %89, %88, %cst_14 {dimension_numbers = #tpu.dot_dimension_numbers<[1], [0], [0], [1], [0, 0, 1, 1], [], []>} : vector<4x18xf32>, vector<18x128xf32>, vector<4x128xf32> -> vector<4x128xf32>
    %91 = vector.extract_strided_slice %10 {offsets = [4, 0], sizes = [4, 1], strides = [1, 1]} : vector<8x1xf32> to vector<4x1xf32>
    %92 = vector.broadcast %91 : vector<4x1xf32> to vector<4x128xf32>
    %93 = arith.addf %90, %92 : vector<4x128xf32>
    %cst_15 = arith.constant 0.000000e+00 : f32
    %94 = vector.broadcast %cst_15 : f32 to vector<4x128xf32>
    %95 = arith.maximumf %93, %94 : vector<4x128xf32>
    %96 = arith.addf %87, %95 : vector<4x128xf32>
    %c0_16 = arith.constant 0 : index
    %c0_17 = arith.constant 0 : index
    %97 = vector.load %arg12[%c0_16, %c0_17] : memref<128x2xf32, #tpu.memory_space<vmem>>, vector<128x2xf32>
    %cst_18 = arith.constant dense<0.000000e+00> : vector<4x2xf32>
    %98 = tpu.matmul %96, %97, %cst_18 {dimension_numbers = #tpu.dot_dimension_numbers<[1], [0], [0], [1], [0, 0, 1, 1], [], []>} : vector<4x128xf32>, vector<128x2xf32>, vector<4x2xf32> -> vector<4x2xf32>
    %c0_19 = arith.constant 0 : index
    %c0_20 = arith.constant 0 : index
    %99 = vector.load %arg6[%c0_19, %c0_20] : memref<32x4xf32, #tpu.memory_space<vmem>>, vector<32x4xf32>
    %cst_21 = arith.constant dense<0.000000e+00> : vector<32x2xf32>
    %100 = tpu.matmul %99, %98, %cst_21 {dimension_numbers = #tpu.dot_dimension_numbers<[1], [0], [0], [1], [0, 0, 1, 1], [], []>} : vector<32x4xf32>, vector<4x2xf32>, vector<32x2xf32> -> vector<32x2xf32>
    %c0_22 = arith.constant 0 : index
    %c0_23 = arith.constant 0 : index
    %101 = vector.load %arg7[%c0_22, %c0_23] : memref<32x1xf32, #tpu.memory_space<vmem>>, vector<32x1xf32>
    %102 = vector.broadcast %101 : vector<32x1xf32> to vector<32x2xf32>
    %103 = arith.addf %100, %102 : vector<32x2xf32>
    %cst_24 = arith.constant 0.000000e+00 : f32
    %104 = vector.broadcast %cst_24 : f32 to vector<32x2xf32>
    %105 = arith.maximumf %103, %104 : vector<32x2xf32>
    %c0_25 = arith.constant 0 : index
    %c0_26 = arith.constant 0 : index
    %106 = vector.load %arg8[%c0_25, %c0_26] : memref<8x32xf32, #tpu.memory_space<vmem>>, vector<8x32xf32>
    %cst_27 = arith.constant dense<0.000000e+00> : vector<8x2xf32>
    %107 = tpu.matmul %106, %105, %cst_27 {dimension_numbers = #tpu.dot_dimension_numbers<[1], [0], [0], [1], [0, 0, 1, 1], [], []>} : vector<8x32xf32>, vector<32x2xf32>, vector<8x2xf32> -> vector<8x2xf32>
    %c0_28 = arith.constant 0 : index
    %c0_29 = arith.constant 0 : index
    %108 = vector.load %arg9[%c0_28, %c0_29] : memref<8x1xf32, #tpu.memory_space<vmem>>, vector<8x1xf32>
    %109 = vector.broadcast %108 : vector<8x1xf32> to vector<8x2xf32>
    %110 = arith.addf %107, %109 : vector<8x2xf32>
    %111 = vector.extract_strided_slice %110 {offsets = [0, 0], sizes = [4, 2], strides = [1, 1]} : vector<8x2xf32> to vector<4x2xf32>
    %112 = vector.extract_strided_slice %110 {offsets = [4, 0], sizes = [4, 2], strides = [1, 1]} : vector<8x2xf32> to vector<4x2xf32>
    %113 = arith.maximumf %111, %112 : vector<4x2xf32>
    %114 = arith.subf %111, %113 : vector<4x2xf32>
    %115 = math.exp %114 : vector<4x2xf32>
    %116 = arith.subf %112, %113 : vector<4x2xf32>
    %117 = math.exp %116 : vector<4x2xf32>
    %118 = arith.addf %115, %117 : vector<4x2xf32>
    %119 = tpu.reciprocal %118 : vector<4x2xf32> -> vector<4x2xf32>
    %120 = arith.mulf %115, %119 : vector<4x2xf32>
    %121 = arith.mulf %117, %119 : vector<4x2xf32>
    %c0_30 = arith.constant 0 : index
    %c0_31 = arith.constant 0 : index
    %122 = vector.load %arg13[%c0_30, %c0_31] : memref<2x128xf32, #tpu.memory_space<vmem>>, vector<2x128xf32>
    %cst_32 = arith.constant dense<0.000000e+00> : vector<4x128xf32>
    %123 = tpu.matmul %120, %122, %cst_32 {dimension_numbers = #tpu.dot_dimension_numbers<[1], [0], [0], [1], [0, 0, 1, 1], [], []>} : vector<4x2xf32>, vector<2x128xf32>, vector<4x128xf32> -> vector<4x128xf32>
    %124 = arith.mulf %87, %123 : vector<4x128xf32>
    %cst_33 = arith.constant dense<0.000000e+00> : vector<4x128xf32>
    %125 = tpu.matmul %121, %122, %cst_33 {dimension_numbers = #tpu.dot_dimension_numbers<[1], [0], [0], [1], [0, 0, 1, 1], [], []>} : vector<4x2xf32>, vector<2x128xf32>, vector<4x128xf32> -> vector<4x128xf32>
    %126 = arith.mulf %95, %125 : vector<4x128xf32>
    %127 = arith.addf %124, %126 : vector<4x128xf32>
    %c0_34 = arith.constant 0 : index
    %c0_35 = arith.constant 0 : index
    %128 = vector.load %arg10[%c0_34, %c0_35] : memref<16x4xf32, #tpu.memory_space<vmem>>, vector<16x4xf32>
    %cst_36 = arith.constant dense<0.000000e+00> : vector<16x128xf32>
    %129 = tpu.matmul %128, %127, %cst_36 {dimension_numbers = #tpu.dot_dimension_numbers<[1], [0], [0], [1], [0, 0, 1, 1], [], []>} : vector<16x4xf32>, vector<4x128xf32>, vector<16x128xf32> -> vector<16x128xf32>
    %c0_37 = arith.constant 0 : index
    %c0_38 = arith.constant 0 : index
    %130 = vector.load %arg11[%c0_37, %c0_38] : memref<16x1xf32, #tpu.memory_space<vmem>>, vector<16x1xf32>
    %131 = vector.broadcast %130 : vector<16x1xf32> to vector<16x128xf32>
    %132 = arith.addf %129, %131 : vector<16x128xf32>
    %133 = arith.addf %132, %0 : vector<16x128xf32>
    %cst_39 = arith.constant 0.000000e+00 : f32
    %134 = vector.broadcast %cst_39 : f32 to vector<16x128xf32>
    %135 = arith.maximumf %133, %134 : vector<16x128xf32>
    %c0_40 = arith.constant 0 : index
    %c0_41 = arith.constant 0 : index
    %136 = vector.load %arg15[%c0_40, %c0_41] : memref<16x128xf32, #tpu.memory_space<vmem>>, vector<16x128xf32>
    tpu.vector_store %arg15[%c0_40, %c0_41], %135 {strides = array<i32>} : memref<16x128xf32, #tpu.memory_space<vmem>>, vector<16x128xf32>,
    return
  }
  func.func @transform_0(%arg0: i32) -> (i32, i32) {
    %c0_i32 = arith.constant 0 : i32
    %c0_i32_0 = arith.constant 0 : i32
    %c0_i32_1 = arith.constant 0 : i32
    return %c0_i32, %c0_i32_0 : i32, i32
  }
  func.func @transform_1(%arg0: i32) -> (i32, i32) {
    %c0_i32 = arith.constant 0 : i32
    %c0_i32_0 = arith.constant 0 : i32
    %c0_i32_1 = arith.constant 0 : i32
    return %c0_i32, %c0_i32_0 : i32, i32
  }
  func.func @transform_2(%arg0: i32) -> (i32, i32) {
    %c0_i32 = arith.constant 0 : i32
    %c0_i32_0 = arith.constant 0 : i32
    %c0_i32_1 = arith.constant 0 : i32
    return %c0_i32, %c0_i32_0 : i32, i32
  }
  func.func @transform_3(%arg0: i32) -> (i32, i32) {
    %c0_i32 = arith.constant 0 : i32
    %c0_i32_0 = arith.constant 0 : i32
    %c0_i32_1 = arith.constant 0 : i32
    return %c0_i32, %c0_i32_0 : i32, i32
  }
  func.func @transform_4(%arg0: i32) -> (i32, i32) {
    %c0_i32 = arith.constant 0 : i32
    %c0_i32_0 = arith.constant 0 : i32
    %c0_i32_1 = arith.constant 0 : i32
    return %c0_i32, %c0_i32_0 : i32, i32
  }
  func.func @transform_5(%arg0: i32) -> (i32, i32) {
    %c0_i32 = arith.constant 0 : i32
    %c0_i32_0 = arith.constant 0 : i32
    %c0_i32_1 = arith.constant 0 : i32
    return %c0_i32, %c0_i32_0 : i32, i32
  }
  func.func @transform_6(%arg0: i32) -> (i32, i32) {
    %c0_i32 = arith.constant 0 : i32
    %c0_i32_0 = arith.constant 0 : i32
    %c0_i32_1 = arith.constant 0 : i32
    return %c0_i32, %c0_i32_0 : i32, i32
  }
  func.func @transform_7(%arg0: i32) -> (i32, i32) {
    %c0_i32 = arith.constant 0 : i32
    %c0_i32_0 = arith.constant 0 : i32
    %c0_i32_1 = arith.constant 0 : i32
    return %c0_i32, %c0_i32_0 : i32, i32
  }
  func.func @transform_8(%arg0: i32) -> (i32, i32) {
    %c0_i32 = arith.constant 0 : i32
    %c0_i32_0 = arith.constant 0 : i32
    %c0_i32_1 = arith.constant 0 : i32
    return %c0_i32, %c0_i32_0 : i32, i32
  }
  func.func @transform_9(%arg0: i32) -> (i32, i32) {
    %c0_i32 = arith.constant 0 : i32
    %c0_i32_0 = arith.constant 0 : i32
    %c0_i32_1 = arith.constant 0 : i32
    return %c0_i32, %c0_i32_0 : i32, i32
  }
  func.func @transform_10(%arg0: i32) -> (i32, i32) {
    %c0_i32 = arith.constant 0 : i32
    %c0_i32_0 = arith.constant 0 : i32
    %c0_i32_1 = arith.constant 0 : i32
    return %c0_i32, %c0_i32_0 : i32, i32
  }
  func.func @transform_11(%arg0: i32) -> (i32, i32) {
    %c0_i32 = arith.constant 0 : i32
    %c0_i32_0 = arith.constant 0 : i32
    %c0_i32_1 = arith.constant 0 : i32
    return %c0_i32, %c0_i32_0 : i32, i32
  }
  func.func @transform_12(%arg0: i32) -> (i32, i32) {
    %c0_i32 = arith.constant 0 : i32
    %c0_i32_0 = arith.constant 0 : i32
    %c0_i32_1 = arith.constant 0 : i32
    return %c0_i32, %c0_i32_0 : i32, i32
  }
  func.func @transform_13(%arg0: i32) -> (i32, i32) {
    %c0_i32 = arith.constant 0 : i32
    %c0_i32_0 = arith.constant 0 : i32
    %c0_i32_1 = arith.constant 0 : i32
    return %c0_i32, %c0_i32_0 : i32, i32
  }
  func.func @transform_14(%arg0: i32) -> (i32, i32) {
    %c0_i32 = arith.constant 0 : i32
    %c0_i32_0 = arith.constant 0 : i32
    %c0_i32_1 = arith.constant 0 : i32
    return %c0_i32, %c0_i32_0 : i32, i32
  }
}

</mosaic_0001>

<llo_original>
// kernel: pallas_forward.1
$region0: #{pallas_forward.1}
  #allocation0 [shape = 'u32[]', space=smem, size = 0x4, offset = 0x4, fixed_abs, tag = 'smem constant byte address 0x4 - core index']
  #allocation1 [shape = 'u32[144,128]{1,0:T(1,128)}', space=vmem, size = 0x12000, scoped, tag = 'internal scratch']
  %s0 = inlined_call_operand.vmem [shape: f32[16,128], index: 0, kind: input, shape index: {}]
  %s1 = inlined_call_operand.vmem [shape: f32[4,16], index: 1, kind: input, shape index: {}]
  %s2 = inlined_call_operand.vmem [shape: f32[4,1], index: 2, kind: input, shape index: {}]
  %s3 = inlined_call_operand.vmem [shape: f32[8,18], index: 3, kind: input, shape index: {}]
  %s4 = inlined_call_operand.vmem [shape: f32[8,1], index: 4, kind: input, shape index: {}]
  %s5 = inlined_call_operand.vmem [shape: f32[32,4], index: 5, kind: input, shape index: {}]
  %s6 = inlined_call_operand.vmem [shape: f32[32,1], index: 6, kind: input, shape index: {}]
  %s7 = inlined_call_operand.vmem [shape: f32[8,32], index: 7, kind: input, shape index: {}]
  %s8 = inlined_call_operand.vmem [shape: f32[8,1], index: 8, kind: input, shape index: {}]
  %s9 = inlined_call_operand.vmem [shape: f32[16,4], index: 9, kind: input, shape index: {}]
  %s10 = inlined_call_operand.vmem [shape: f32[16,1], index: 10, kind: input, shape index: {}]
  %s11 = inlined_call_operand.vmem [shape: f32[128,2], index: 11, kind: input, shape index: {}]
  %s12 = inlined_call_operand.vmem [shape: f32[2,128], index: 12, kind: input, shape index: {}]
  %s13 = inlined_call_operand.vmem [shape: f32[9,128], index: 13, kind: input, shape index: {}]
  %s14 = inlined_call_operand.vmem [shape: f32[16,128], index: 14, kind: output, shape index: {}]
  %s15 = sld [smem:[#allocation0]]
  $region66: #{pallas_forward.1} parent=0
    _
  %s17 = ssub.s32 1, %s15
  %s18 = scalar_select 0, %s17, %s15
  // Predicated region
  $region2: #{pallas_forward.1} parent=0 // pred_check
    _
  $region3: #{pallas_forward.1} parent=0 // pred_check_branch
    %20 = sbr.rel (0) target = $region5
  $region4: #{pallas_forward.1} parent=0 // pred_region
    _
  $region5: #{pallas_forward.1} parent=0 // pred_fallthru
    _
  // Predicated region
  $region6: #{pallas_forward.1} parent=0 // pred_check
    _
  $region7: #{pallas_forward.1} parent=0 // pred_check_branch
    %22 = sbr.rel (0) target = $region9
  $region8: #{pallas_forward.1} parent=0 // pred_region
    _
  $region9: #{pallas_forward.1} parent=0 // pred_fallthru
    _
  // Predicated region
  $region10: #{pallas_forward.1} parent=0 // pred_check
    _
  $region11: #{pallas_forward.1} parent=0 // pred_check_branch
    %24 = sbr.rel (0) target = $region13
  $region12: #{pallas_forward.1} parent=0 // pred_region
    _
  $region13: #{pallas_forward.1} parent=0 // pred_fallthru
    _
  // Predicated region
  $region14: #{pallas_forward.1} parent=0 // pred_check
    _
  $region15: #{pallas_forward.1} parent=0 // pred_check_branch
    %26 = sbr.rel (0) target = $region17
  $region16: #{pallas_forward.1} parent=0 // pred_region
    _
  $region17: #{pallas_forward.1} parent=0 // pred_fallthru
    _
  // Predicated region
  $region18: #{pallas_forward.1} parent=0 // pred_check
    _
  $region19: #{pallas_forward.1} parent=0 // pred_check_branch
    %28 = sbr.rel (0) target = $region21
  $region20: #{pallas_forward.1} parent=0 // pred_region
    _
  $region21: #{pallas_forward.1} parent=0 // pred_fallthru
    _
  // Predicated region
  $region22: #{pallas_forward.1} parent=0 // pred_check
    _
  $region23: #{pallas_forward.1} parent=0 // pred_check_branch
    %30 = sbr.rel (0) target = $region25
  $region24: #{pallas_forward.1} parent=0 // pred_region
    _
  $region25: #{pallas_forward.1} parent=0 // pred_fallthru
    _
  // Predicated region
  $region26: #{pallas_forward.1} parent=0 // pred_check
    _
  $region27: #{pallas_forward.1} parent=0 // pred_check_branch
    %32 = sbr.rel (0) target = $region29
  $region28: #{pallas_forward.1} parent=0 // pred_region
    _
  $region29: #{pallas_forward.1} parent=0 // pred_fallthru
    _
  // Predicated region
  $region30: #{pallas_forward.1} parent=0 // pred_check
    _
  $region31: #{pallas_forward.1} parent=0 // pred_check_branch
    %34 = sbr.rel (0) target = $region33
  $region32: #{pallas_forward.1} parent=0 // pred_region
    _
  $region33: #{pallas_forward.1} parent=0 // pred_fallthru
    _
  // Predicated region
  $region34: #{pallas_forward.1} parent=0 // pred_check
    _
  $region35: #{pallas_forward.1} parent=0 // pred_check_branch
    %36 = sbr.rel (0) target = $region37
  $region36: #{pallas_forward.1} parent=0 // pred_region
    _
  $region37: #{pallas_forward.1} parent=0 // pred_fallthru
    _
  // Predicated region
  $region38: #{pallas_forward.1} parent=0 // pred_check
    _
  $region39: #{pallas_forward.1} parent=0 // pred_check_branch
    %38 = sbr.rel (0) target = $region41
  $region40: #{pallas_forward.1} parent=0 // pred_region
    _
  $region41: #{pallas_forward.1} parent=0 // pred_fallthru
    _
  // Predicated region
  $region42: #{pallas_forward.1} parent=0 // pred_check
    _
  $region43: #{pallas_forward.1} parent=0 // pred_check_branch
    %40 = sbr.rel (0) target = $region45
  $region44: #{pallas_forward.1} parent=0 // pred_region
    _
  $region45: #{pallas_forward.1} parent=0 // pred_fallthru
    _
  // Predicated region
  $region46: #{pallas_forward.1} parent=0 // pred_check
    _
  $region47: #{pallas_forward.1} parent=0 // pred_check_branch
    %42 = sbr.rel (0) target = $region49
  $region48: #{pallas_forward.1} parent=0 // pred_region
    _
  $region49: #{pallas_forward.1} parent=0 // pred_fallthru
    _
  // Predicated region
  $region50: #{pallas_forward.1} parent=0 // pred_check
    _
  $region51: #{pallas_forward.1} parent=0 // pred_check_branch
    %44 = sbr.rel (0) target = $region53
  $region52: #{pallas_forward.1} parent=0 // pred_region
    _
  $region53: #{pallas_forward.1} parent=0 // pred_fallthru
    _
  // Predicated region
  $region54: #{pallas_forward.1} parent=0 // pred_check
    _
  $region55: #{pallas_forward.1} parent=0 // pred_check_branch
    %46 = sbr.rel (0) target = $region57
  $region56: #{pallas_forward.1} parent=0 // pred_region
    _
  $region57: #{pallas_forward.1} parent=0 // pred_fallthru
    _
  %v47 = vld [vmem:[%s0] sm:$0xff]
  %v48 = vld [vmem:[%s0 + $0x8] sm:$0xff]
  %v49 = vld [vmem:[%s1] sm:$0xf]
  %v50 = vld [vmem:[%s2] sm:$0xf]
  %52 = vset.pattern.permute.xlu0 0
  %53 = vperm.xlu0 %52, %v50
  %v54 = vpop.permute.xlu0 %53
  %vm56 = vcmask 130048
  %v58 = vsel %vm56, %v49, 0
  %60 = vmatprep.subr.mxu0 0.0
  %61 = vmatpush1.msra.mxu0 0.0
  %62 = vmatprep.subr.mxu0 0.0
  %63 = vmatpush1.msra.mxu0 0.0
  %64 = vmatprep.subr.mxu0 0.0
  %65 = vmatpush1.msra.mxu0 0.0
  %66 = vmatprep.subr.mxu0 0.0
  %67 = vmatpush1.msra.mxu0 0.0
  %68 = vmatprep.subr.mxu0 0.0
  %69 = vmatpush1.msra.mxu0 0.0
  %70 = vmatprep.subr.mxu0 0.0
  %71 = vmatpush1.msra.mxu0 0.0
  %72 = vmatprep.subr.mxu0 0.0
  %73 = vmatpush1.msra.mxu0 0.0
  %74 = vmatprep.subr.mxu0 0.0
  %75 = vmatpush1.msra.mxu0 0.0
  %76 = vmatprep.subr.mxu0 0.0
  %77 = vmatpush1.msra.mxu0 0.0
  %78 = vmatprep.subr.mxu0 0.0
  %79 = vmatpush1.msra.mxu0 0.0
  %80 = vmatprep.subr.mxu0 0.0
  %81 = vmatpush1.msra.mxu0 0.0
  %82 = vmatprep.subr.mxu0 0.0
  %83 = vmatpush1.msra.mxu0 0.0
  %84 = vmatprep.subr.mxu0 0.0
  %85 = vmatpush1.msra.mxu0 0.0
  %86 = vmatprep.subr.mxu0 0.0
  %87 = vmatpush1.msra.mxu0 0.0
  %88 = vmatprep.subr.mxu0 0.0
  %89 = vmatpush1.msra.mxu0 %v48
  %90 = vmatprep.subr.mxu0 0.0
  %91 = vmatpush1.msra.mxu0 %v47
  %92 = vmatprep.subr.mxu0 0.0
  %93 = vmatpush2.msra.mxu0 0.0
  %94 = vmatprep.subr.mxu0 0.0
  %95 = vmatpush2.msra.mxu0 0.0
  %96 = vmatprep.subr.mxu0 0.0
  %97 = vmatpush2.msra.mxu0 0.0
  %98 = vmatprep.subr.mxu0 0.0
  %99 = vmatpush2.msra.mxu0 0.0
  %100 = vmatprep.subr.mxu0 0.0
  %101 = vmatpush2.msra.mxu0 0.0
  %102 = vmatprep.subr.mxu0 0.0
  %103 = vmatpush2.msra.mxu0 0.0
  %104 = vmatprep.subr.mxu0 0.0
  %105 = vmatpush2.msra.mxu0 0.0
  %106 = vmatprep.subr.mxu0 0.0
  %107 = vmatpush2.msra.mxu0 0.0
  %108 = vmatprep.subr.mxu0 0.0
  %109 = vmatpush2.msra.mxu0 0.0
  %110 = vmatprep.subr.mxu0 0.0
  %111 = vmatpush2.msra.mxu0 0.0
  %112 = vmatprep.subr.mxu0 0.0
  %113 = vmatpush2.msra.mxu0 0.0
  %114 = vmatprep.subr.mxu0 0.0
  %115 = vmatpush2.msra.mxu0 0.0
  %116 = vmatprep.subr.mxu0 0.0
  %117 = vmatpush2.msra.mxu0 0.0
  %118 = vmatprep.subr.mxu0 0.0
  %119 = vmatpush2.msra.mxu0 0.0
  %120 = vmatprep.subr.mxu0 0.0
  %121 = vmatpush2.msra.mxu0 0.0
  %122 = vmatprep.subr.mxu0 0.0
  %123 = vmatpush2.msra.mxu0 0.0
  %124 = vmatprep.mubr.f32.mxu0 0.0
  %125 = vmatmul.mubr.f32.gmra.mxu0 %v58
  %v126 = vpop.f32.mrf.mxu0
  %v127 = vadd.f32 %v54, %v126
  %v128 = vpop.f32.mrf.mxu0
  %129 = vdwg.mxu0
  %v130 = vmax.f32 %v127, 0.0
  %v131 = vld [vmem:[%s13] sm:$0xff]
  %v132 = vld [vmem:[%s13 + $0x8] sm:$0x1]
  %v133 = vld [vmem:[%s3] sm:$0xff]
  %v134 = vld [vmem:[%s4] sm:$0xff]
  %136 = vrot.lane.b32.xlu0 %v130, 9
  %v137 = vpop.permute.xlu0 %136
  %v139 = vlaneseq
  %v140 = vshrl.u32 %v139, 7
  %v141 = vsub.s32 0, %v140
  %v142 = vrot.slane %v131, %v141
  %v143 = vmul.f32 %v137, %v142
  %144 = vrot.lane.b32.xlu0 %v130, 8
  %v145 = vpop.permute.xlu0 %144
  %v147 = vlaneseq
  %v148 = vshrl.u32 %v147, 7
  %v149 = vsub.s32 1, %v148
  %v150 = vrot.slane %v131, %v149
  %v151 = vmul.f32 %v145, %v150
  %152 = vrot.lane.b32.xlu0 %v130, 7
  %v153 = vpop.permute.xlu0 %152
  %v155 = vlaneseq
  %v156 = vshrl.u32 %v155, 7
  %v157 = vsub.s32 2, %v156
  %v158 = vrot.slane %v131, %v157
  %v159 = vmul.f32 %v153, %v158
  %160 = vrot.lane.b32.xlu0 %v130, 1
  %v161 = vpop.permute.xlu0 %160
  %v163 = vlaneseq
  %v164 = vshrl.u32 %v163, 7
  %v165 = vsub.s32 3, %v164
  %v166 = vrot.slane %v131, %v165
  %v167 = vmul.f32 %v161, %v166
  %v168 = vlaneseq
  %v169 = vshrl.u32 %v168, 7
  %v170 = vsub.s32 4, %v169
  %v171 = vrot.slane %v131, %v170
  %v172 = vmul.f32 %v130, %v171
  %173 = vrot.lane.b32.xlu0 %v130, 127
  %v174 = vpop.permute.xlu0 %173
  %v176 = vlaneseq
  %v177 = vshrl.u32 %v176, 7
  %v178 = vsub.s32 5, %v177
  %v179 = vrot.slane %v131, %v178
  %v180 = vmul.f32 %v174, %v179
  %181 = vrot.lane.b32.xlu0 %v130, 121
  %v182 = vpop.permute.xlu0 %181
  %v184 = vlaneseq
  %v185 = vshrl.u32 %v184, 7
  %v186 = vsub.s32 6, %v185
  %v187 = vrot.slane %v131, %v186
  %v188 = vmul.f32 %v182, %v187
  %189 = vrot.lane.b32.xlu0 %v130, 120
  %v190 = vpop.permute.xlu0 %189
  %v192 = vlaneseq
  %v193 = vshrl.u32 %v192, 7
  %v194 = vsub.s32 7, %v193
  %v195 = vrot.slane %v131, %v194
  %v196 = vmul.f32 %v190, %v195
  %197 = vrot.lane.b32.xlu0 %v130, 119
  %v198 = vpop.permute.xlu0 %197
  %v200 = vlaneseq
  %v201 = vshrl.u32 %v200, 7
  %v202 = vsub.s32 0, %v201
  %v203 = vrot.slane %v132, %v202
  %v204 = vmul.f32 %v198, %v203
  %v206 = vrot.slane %v151, 6
  %v209 = vrot.slane %v159, 4
  %v212 = vrot.slane %v167, 2
  %v215 = vrot.slane %v180, 6
  %v218 = vrot.slane %v188, 4
  %v221 = vrot.slane %v196, 2
  %vm223 = vcmask 1041408
  %v224 = vsel %vm223, %v143, %v206
  %vm225 = vcmask 1043456
  %v226 = vsel %vm225, %v224, %v209
  %vm227 = vcmask 1045504
  %v228 = vsel %vm227, %v226, %v212
  %v229 = vsel %vm223, %v172, %v215
  %v230 = vsel %vm225, %v229, %v218
  %v231 = vsel %vm227, %v230, %v221
  %233 = vset.pattern.permute.xlu0 0
  %234 = vperm.xlu0 %233, %v134
  %v235 = vpop.permute.xlu0 %234
  %vm237 = vcmask 146432
  %v239 = vsel %vm237, %v133, 0
  %v242 = vsel %vm223, %v204, 0
  %244 = vmatprep.subr.mxu0 0.0
  %245 = vmatpush1.msra.mxu0 0.0
  %246 = vmatprep.subr.mxu0 0.0
  %247 = vmatpush1.msra.mxu0 0.0
  %248 = vmatprep.subr.mxu0 0.0
  %249 = vmatpush1.msra.mxu0 0.0
  %250 = vmatprep.subr.mxu0 0.0
  %251 = vmatpush1.msra.mxu0 0.0
  %252 = vmatprep.subr.mxu0 0.0
  %253 = vmatpush1.msra.mxu0 0.0
  %254 = vmatprep.subr.mxu0 0.0
  %255 = vmatpush1.msra.mxu0 0.0
  %256 = vmatprep.subr.mxu0 0.0
  %257 = vmatpush1.msra.mxu0 0.0
  %258 = vmatprep.subr.mxu0 0.0
  %259 = vmatpush1.msra.mxu0 0.0
  %260 = vmatprep.subr.mxu0 0.0
  %261 = vmatpush1.msra.mxu0 0.0
  %262 = vmatprep.subr.mxu0 0.0
  %263 = vmatpush1.msra.mxu0 0.0
  %264 = vmatprep.subr.mxu0 0.0
  %265 = vmatpush1.msra.mxu0 0.0
  %266 = vmatprep.subr.mxu0 0.0
  %267 = vmatpush1.msra.mxu0 0.0
  %268 = vmatprep.subr.mxu0 0.0
  %269 = vmatpush1.msra.mxu0 0.0
  %270 = vmatprep.subr.mxu0 0.0
  %271 = vmatpush1.msra.mxu0 %v242
  %272 = vmatprep.subr.mxu0 0.0
  %273 = vmatpush1.msra.mxu0 %v231
  %274 = vmatprep.subr.mxu0 0.0
  %275 = vmatpush1.msra.mxu0 %v228
  %276 = vmatprep.subr.mxu0 0.0
  %277 = vmatpush2.msra.mxu0 0.0
  %278 = vmatprep.subr.mxu0 0.0
  %279 = vmatpush2.msra.mxu0 0.0
  %280 = vmatprep.subr.mxu0 0.0
  %281 = vmatpush2.msra.mxu0 0.0
  %282 = vmatprep.subr.mxu0 0.0
  %283 = vmatpush2.msra.mxu0 0.0
  %284 = vmatprep.subr.mxu0 0.0
  %285 = vmatpush2.msra.mxu0 0.0
  %286 = vmatprep.subr.mxu0 0.0
  %287 = vmatpush2.msra.mxu0 0.0
  %288 = vmatprep.subr.mxu0 0.0
  %289 = vmatpush2.msra.mxu0 0.0
  %290 = vmatprep.subr.mxu0 0.0
  %291 = vmatpush2.msra.mxu0 0.0
  %292 = vmatprep.subr.mxu0 0.0
  %293 = vmatpush2.msra.mxu0 0.0
  %294 = vmatprep.subr.mxu0 0.0
  %295 = vmatpush2.msra.mxu0 0.0
  %296 = vmatprep.subr.mxu0 0.0
  %297 = vmatpush2.msra.mxu0 0.0
  %298 = vmatprep.subr.mxu0 0.0
  %299 = vmatpush2.msra.mxu0 0.0
  %300 = vmatprep.subr.mxu0 0.0
  %301 = vmatpush2.msra.mxu0 0.0
  %302 = vmatprep.subr.mxu0 0.0
  %303 = vmatpush2.msra.mxu0 0.0
  %304 = vmatprep.subr.mxu0 0.0
  %305 = vmatpush2.msra.mxu0 0.0
  %306 = vmatprep.subr.mxu0 0.0
  %307 = vmatpush2.msra.mxu0 0.0
  %308 = vmatprep.mubr.f32.mxu0 0.0
  %309 = vmatmul.mubr.f32.gmra.mxu0 %v239
  %v310 = vpop.f32.mrf.mxu0
  %v311 = vadd.f32 %v235, %v310
  %v312 = vpop.f32.mrf.mxu0
  %313 = vdwg.mxu0
  %v314 = vmax.f32 %v311, 0.0
  %v316 = vrot.slane %v143, 2
  %v318 = vrot.slane %v159, 6
  %v320 = vrot.slane %v167, 4
  %v323 = vrot.slane %v172, 2
  %v325 = vrot.slane %v188, 6
  %v327 = vrot.slane %v196, 4
  %v329 = vrot.slane %v204, 2
  %v330 = vsel %vm223, %v316, %v151
  %v331 = vsel %vm225, %v330, %v318
  %v332 = vsel %vm227, %v331, %v320
  %v333 = vsel %vm223, %v323, %v180
  %v334 = vsel %vm225, %v333, %v325
  %v335 = vsel %vm227, %v334, %v327
  %v336 = vrot.slane %v133, 4
  %v337 = vrot.slane %v235, 4
  %v339 = vsel %vm237, %v336, 0
  %v341 = vsel %vm223, %v329, 0
  %343 = vmatprep.subr.mxu0 0.0
  %344 = vmatpush1.msra.mxu0 0.0
  %345 = vmatprep.subr.mxu0 0.0
  %346 = vmatpush1.msra.mxu0 0.0
  %347 = vmatprep.subr.mxu0 0.0
  %348 = vmatpush1.msra.mxu0 0.0
  %349 = vmatprep.subr.mxu0 0.0
  %350 = vmatpush1.msra.mxu0 0.0
  %351 = vmatprep.subr.mxu0 0.0
  %352 = vmatpush1.msra.mxu0 0.0
  %353 = vmatprep.subr.mxu0 0.0
  %354 = vmatpush1.msra.mxu0 0.0
  %355 = vmatprep.subr.mxu0 0.0
  %356 = vmatpush1.msra.mxu0 0.0
  %357 = vmatprep.subr.mxu0 0.0
  %358 = vmatpush1.msra.mxu0 0.0
  %359 = vmatprep.subr.mxu0 0.0
  %360 = vmatpush1.msra.mxu0 0.0
  %361 = vmatprep.subr.mxu0 0.0
  %362 = vmatpush1.msra.mxu0 0.0
  %363 = vmatprep.subr.mxu0 0.0
  %364 = vmatpush1.msra.mxu0 0.0
  %365 = vmatprep.subr.mxu0 0.0
  %366 = vmatpush1.msra.mxu0 0.0
  %367 = vmatprep.subr.mxu0 0.0
  %368 = vmatpush1.msra.mxu0 0.0
  %369 = vmatprep.subr.mxu0 0.0
  %370 = vmatpush1.msra.mxu0 %v341
  %371 = vmatprep.subr.mxu0 0.0
  %372 = vmatpush1.msra.mxu0 %v335
  %373 = vmatprep.subr.mxu0 0.0
  %374 = vmatpush1.msra.mxu0 %v332
  %375 = vmatprep.subr.mxu0 0.0
  %376 = vmatpush2.msra.mxu0 0.0
  %377 = vmatprep.subr.mxu0 0.0
  %378 = vmatpush2.msra.mxu0 0.0
  %379 = vmatprep.subr.mxu0 0.0
  %380 = vmatpush2.msra.mxu0 0.0
  %381 = vmatprep.subr.mxu0 0.0
  %382 = vmatpush2.msra.mxu0 0.0
  %383 = vmatprep.subr.mxu0 0.0
  %384 = vmatpush2.msra.mxu0 0.0
  %385 = vmatprep.subr.mxu0 0.0
  %386 = vmatpush2.msra.mxu0 0.0
  %387 = vmatprep.subr.mxu0 0.0
  %388 = vmatpush2.msra.mxu0 0.0
  %389 = vmatprep.subr.mxu0 0.0
  %390 = vmatpush2.msra.mxu0 0.0
  %391 = vmatprep.subr.mxu0 0.0
  %392 = vmatpush2.msra.mxu0 0.0
  %393 = vmatprep.subr.mxu0 0.0
  %394 = vmatpush2.msra.mxu0 0.0
  %395 = vmatprep.subr.mxu0 0.0
  %396 = vmatpush2.msra.mxu0 0.0
  %397 = vmatprep.subr.mxu0 0.0
  %398 = vmatpush2.msra.mxu0 0.0
  %399 = vmatprep.subr.mxu0 0.0
  %400 = vmatpush2.msra.mxu0 0.0
  %401 = vmatprep.subr.mxu0 0.0
  %402 = vmatpush2.msra.mxu0 0.0
  %403 = vmatprep.subr.mxu0 0.0
  %404 = vmatpush2.msra.mxu0 0.0
  %405 = vmatprep.subr.mxu0 0.0
  %406 = vmatpush2.msra.mxu0 0.0
  %407 = vmatprep.mubr.f32.mxu0 0.0
  %408 = vmatmul.mubr.f32.gmra.mxu0 %v339
  %v409 = vpop.f32.mrf.mxu0
  %v410 = vadd.f32 %v337, %v409
  %v411 = vpop.f32.mrf.mxu0
  %412 = vdwg.mxu0
  %v413 = vmax.f32 %v410, 0.0
  %v414 = vadd.f32 %v314, %v413
  %v415 = vld [vmem:[%s11] sm:$0xff]
  %v416 = vld [vmem:[%s11 + $0x8] sm:$0xff]
  %v417 = vld [vmem:[%s11 + $0x10] sm:$0xff]
  %v418 = vld [vmem:[%s11 + $0x18] sm:$0xff]
  %v419 = vld [vmem:[%s11 + $0x20] sm:$0xff]
  %v420 = vld [vmem:[%s11 + $0x28] sm:$0xff]
  %v421 = vld [vmem:[%s11 + $0x30] sm:$0xff]
  %v422 = vld [vmem:[%s11 + $0x38] sm:$0xff]
  %v423 = vld [vmem:[%s11 + $0x40] sm:$0xff]
  %v424 = vld [vmem:[%s11 + $0x48] sm:$0xff]
  %v425 = vld [vmem:[%s11 + $0x50] sm:$0xff]
  %v426 = vld [vmem:[%s11 + $0x58] sm:$0xff]
  %v427 = vld [vmem:[%s11 + $0x60] sm:$0xff]
  %v428 = vld [vmem:[%s11 + $0x68] sm:$0xff]
  %v429 = vld [vmem:[%s11 + $0x70] sm:$0xff]
  %v430 = vld [vmem:[%s11 + $0x78] sm:$0xff]
  %431 = vmatprep.subr.mxu0 0.0
  %432 = vmatpush1.msra.mxu0 %v430
  %433 = vmatprep.subr.mxu0 0.0
  %434 = vmatpush1.msra.mxu0 %v429
  %435 = vmatprep.subr.mxu0 0.0
  %436 = vmatpush1.msra.mxu0 %v428
  %437 = vmatprep.subr.mxu0 0.0
  %438 = vmatpush1.msra.mxu0 %v427
  %439 = vmatprep.subr.mxu0 0.0
  %440 = vmatpush1.msra.mxu0 %v426
  %441 = vmatprep.subr.mxu0 0.0
  %442 = vmatpush1.msra.mxu0 %v425
  %443 = vmatprep.subr.mxu0 0.0
  %444 = vmatpush1.msra.mxu0 %v424
  %445 = vmatprep.subr.mxu0 0.0
  %446 = vmatpush1.msra.mxu0 %v423
  %447 = vmatprep.subr.mxu0 0.0
  %448 = vmatpush1.msra.mxu0 %v422
  %449 = vmatprep.subr.mxu0 0.0
  %450 = vmatpush1.msra.mxu0 %v421
  %451 = vmatprep.subr.mxu0 0.0
  %452 = vmatpush1.msra.mxu0 %v420
  %453 = vmatprep.subr.mxu0 0.0
  %454 = vmatpush1.msra.mxu0 %v419
  %455 = vmatprep.subr.mxu0 0.0
  %456 = vmatpush1.msra.mxu0 %v418
  %457 = vmatprep.subr.mxu0 0.0
  %458 = vmatpush1.msra.mxu0 %v417
  %459 = vmatprep.subr.mxu0 0.0
  %460 = vmatpush1.msra.mxu0 %v416
  %461 = vmatprep.subr.mxu0 0.0
  %462 = vmatpush1.msra.mxu0 %v415
  %463 = vmatprep.subr.mxu0 0.0
  %464 = vmatpush2.msra.mxu0 0.0
  %465 = vmatprep.subr.mxu0 0.0
  %466 = vmatpush2.msra.mxu0 0.0
  %467 = vmatprep.subr.mxu0 0.0
  %468 = vmatpush2.msra.mxu0 0.0
  %469 = vmatprep.subr.mxu0 0.0
  %470 = vmatpush2.msra.mxu0 0.0
  %471 = vmatprep.subr.mxu0 0.0
  %472 = vmatpush2.msra.mxu0 0.0
  %473 = vmatprep.subr.mxu0 0.0
  %474 = vmatpush2.msra.mxu0 0.0
  %475 = vmatprep.subr.mxu0 0.0
  %476 = vmatpush2.msra.mxu0 0.0
  %477 = vmatprep.subr.mxu0 0.0
  %478 = vmatpush2.msra.mxu0 0.0
  %479 = vmatprep.subr.mxu0 0.0
  %480 = vmatpush2.msra.mxu0 0.0
  %481 = vmatprep.subr.mxu0 0.0
  %482 = vmatpush2.msra.mxu0 0.0
  %483 = vmatprep.subr.mxu0 0.0
  %484 = vmatpush2.msra.mxu0 0.0
  %485 = vmatprep.subr.mxu0 0.0
  %486 = vmatpush2.msra.mxu0 0.0
  %487 = vmatprep.subr.mxu0 0.0
  %488 = vmatpush2.msra.mxu0 0.0
  %489 = vmatprep.subr.mxu0 0.0
  %490 = vmatpush2.msra.mxu0 0.0
  %491 = vmatprep.subr.mxu0 0.0
  %492 = vmatpush2.msra.mxu0 0.0
  %493 = vmatprep.subr.mxu0 0.0
  %494 = vmatpush2.msra.mxu0 0.0
  %495 = vmatprep.mubr.f32.mxu0 0.0
  %496 = vmatmul.mubr.f32.gmra.mxu0 %v414
  %v497 = vpop.f32.mrf.mxu0
  %v498 = vadd.f32 0.0, %v497
  %v499 = vpop.f32.mrf.mxu0
  %500 = vdwg.mxu0
  %v501 = vld [vmem:[%s5] sm:$0xff]
  %v502 = vld [vmem:[%s5 + $0x8] sm:$0xff]
  %v503 = vld [vmem:[%s5 + $0x10] sm:$0xff]
  %v504 = vld [vmem:[%s5 + $0x18] sm:$0xff]
  %v505 = vld [vmem:[%s6] sm:$0xff]
  %v506 = vld [vmem:[%s6 + $0x8] sm:$0xff]
  %v507 = vld [vmem:[%s6 + $0x10] sm:$0xff]
  %v508 = vld [vmem:[%s6 + $0x18] sm:$0xff]
  %510 = vset.pattern.permute.xlu0 0
  %511 = vperm.xlu0 %510, %v505
  %v512 = vpop.permute.xlu0 %511
  %515 = vset.pattern.permute.xlu0 0
  %516 = vperm.xlu0 %515, %v506
  %v517 = vpop.permute.xlu0 %516
  %520 = vset.pattern.permute.xlu0 0
  %521 = vperm.xlu0 %520, %v507
  %v522 = vpop.permute.xlu0 %521
  %525 = vset.pattern.permute.xlu0 0
  %526 = vperm.xlu0 %525, %v508
  %v527 = vpop.permute.xlu0 %526
  %vm529 = vcmask 31744
  %v531 = vsel %vm529, %v501, 0
  %v534 = vsel %vm529, %v502, 0
  %v537 = vsel %vm529, %v503, 0
  %v540 = vsel %vm529, %v504, 0
  %v543 = vsel %vm225, %v498, 0
  %545 = vmatprep.subr.mxu0 0.0
  %546 = vmatpush1.msra.mxu0 0.0
  %547 = vmatprep.subr.mxu0 0.0
  %548 = vmatpush1.msra.mxu0 0.0
  %549 = vmatprep.subr.mxu0 0.0
  %550 = vmatpush1.msra.mxu0 0.0
  %551 = vmatprep.subr.mxu0 0.0
  %552 = vmatpush1.msra.mxu0 0.0
  %553 = vmatprep.subr.mxu0 0.0
  %554 = vmatpush1.msra.mxu0 0.0
  %555 = vmatprep.subr.mxu0 0.0
  %556 = vmatpush1.msra.mxu0 0.0
  %557 = vmatprep.subr.mxu0 0.0
  %558 = vmatpush1.msra.mxu0 0.0
  %559 = vmatprep.subr.mxu0 0.0
  %560 = vmatpush1.msra.mxu0 0.0
  %561 = vmatprep.subr.mxu0 0.0
  %562 = vmatpush1.msra.mxu0 0.0
  %563 = vmatprep.subr.mxu0 0.0
  %564 = vmatpush1.msra.mxu0 0.0
  %565 = vmatprep.subr.mxu0 0.0
  %566 = vmatpush1.msra.mxu0 0.0
  %567 = vmatprep.subr.mxu0 0.0
  %568 = vmatpush1.msra.mxu0 0.0
  %569 = vmatprep.subr.mxu0 0.0
  %570 = vmatpush1.msra.mxu0 0.0
  %571 = vmatprep.subr.mxu0 0.0
  %572 = vmatpush1.msra.mxu0 0.0
  %573 = vmatprep.subr.mxu0 0.0
  %574 = vmatpush1.msra.mxu0 0.0
  %575 = vmatprep.subr.mxu0 0.0
  %576 = vmatpush1.msra.mxu0 %v543
  %577 = vmatprep.subr.mxu0 0.0
  %578 = vmatpush2.msra.mxu0 0.0
  %579 = vmatprep.subr.mxu0 0.0
  %580 = vmatpush2.msra.mxu0 0.0
  %581 = vmatprep.subr.mxu0 0.0
  %582 = vmatpush2.msra.mxu0 0.0
  %583 = vmatprep.subr.mxu0 0.0
  %584 = vmatpush2.msra.mxu0 0.0
  %585 = vmatprep.subr.mxu0 0.0
  %586 = vmatpush2.msra.mxu0 0.0
  %587 = vmatprep.subr.mxu0 0.0
  %588 = vmatpush2.msra.mxu0 0.0
  %589 = vmatprep.subr.mxu0 0.0
  %590 = vmatpush2.msra.mxu0 0.0
  %591 = vmatprep.subr.mxu0 0.0
  %592 = vmatpush2.msra.mxu0 0.0
  %593 = vmatprep.subr.mxu0 0.0
  %594 = vmatpush2.msra.mxu0 0.0
  %595 = vmatprep.subr.mxu0 0.0
  %596 = vmatpush2.msra.mxu0 0.0
  %597 = vmatprep.subr.mxu0 0.0
  %598 = vmatpush2.msra.mxu0 0.0
  %599 = vmatprep.subr.mxu0 0.0
  %600 = vmatpush2.msra.mxu0 0.0
  %601 = vmatprep.subr.mxu0 0.0
  %602 = vmatpush2.msra.mxu0 0.0
  %603 = vmatprep.subr.mxu0 0.0
  %604 = vmatpush2.msra.mxu0 0.0
  %605 = vmatprep.subr.mxu0 0.0
  %606 = vmatpush2.msra.mxu0 0.0
  %607 = vmatprep.subr.mxu0 0.0
  %608 = vmatpush2.msra.mxu0 0.0
  %609 = vmatprep.mubr.f32.mxu0 0.0
  %610 = vmatmul.mubr.f32.gmra.mxu0 %v531
  %v611 = vpop.f32.mrf.mxu0
  %v612 = vadd.f32 %v512, %v611
  %v613 = vpop.f32.mrf.mxu0
  %614 = vmatprep.mubr.f32.mxu0 0.0
  %615 = vmatmul.mubr.f32.gmra.mxu0 %v534
  %v616 = vpop.f32.mrf.mxu0
  %v617 = vadd.f32 %v517, %v616
  %v618 = vpop.f32.mrf.mxu0
  %619 = vmatprep.mubr.f32.mxu0 0.0
  %620 = vmatmul.mubr.f32.gmra.mxu0 %v537
  %v621 = vpop.f32.mrf.mxu0
  %v622 = vadd.f32 %v522, %v621
  %v623 = vpop.f32.mrf.mxu0
  %624 = vmatprep.mubr.f32.mxu0 0.0
  %625 = vmatmul.mubr.f32.gmra.mxu0 %v540
  %v626 = vpop.f32.mrf.mxu0
  %v627 = vadd.f32 %v527, %v626
  %v628 = vpop.f32.mrf.mxu0
  %629 = vdwg.mxu0
  %v630 = vmax.f32 %v612, 0.0
  %v631 = vmax.f32 %v617, 0.0
  %v632 = vmax.f32 %v622, 0.0
  %v633 = vmax.f32 %v627, 0.0
  %v634 = vld [vmem:[%s7] sm:$0xff]
  %v635 = vld [vmem:[%s8] sm:$0xff]
  %637 = vset.pattern.permute.xlu0 0
  %638 = vperm.xlu0 %637, %v635
  %v639 = vpop.permute.xlu0 %638
  %vm641 = vcmask 261120
  %v643 = vsel %vm641, %v634, 0
  %645 = vmatprep.subr.mxu0 0.0
  %646 = vmatpush1.msra.mxu0 0.0
  %647 = vmatprep.subr.mxu0 0.0
  %648 = vmatpush1.msra.mxu0 0.0
  %649 = vmatprep.subr.mxu0 0.0
  %650 = vmatpush1.msra.mxu0 0.0
  %651 = vmatprep.subr.mxu0 0.0
  %652 = vmatpush1.msra.mxu0 0.0
  %653 = vmatprep.subr.mxu0 0.0
  %654 = vmatpush1.msra.mxu0 0.0
  %655 = vmatprep.subr.mxu0 0.0
  %656 = vmatpush1.msra.mxu0 0.0
  %657 = vmatprep.subr.mxu0 0.0
  %658 = vmatpush1.msra.mxu0 0.0
  %659 = vmatprep.subr.mxu0 0.0
  %660 = vmatpush1.msra.mxu0 0.0
  %661 = vmatprep.subr.mxu0 0.0
  %662 = vmatpush1.msra.mxu0 0.0
  %663 = vmatprep.subr.mxu0 0.0
  %664 = vmatpush1.msra.mxu0 0.0
  %665 = vmatprep.subr.mxu0 0.0
  %666 = vmatpush1.msra.mxu0 0.0
  %667 = vmatprep.subr.mxu0 0.0
  %668 = vmatpush1.msra.mxu0 0.0
  %669 = vmatprep.subr.mxu0 0.0
  %670 = vmatpush1.msra.mxu0 %v633
  %671 = vmatprep.subr.mxu0 0.0
  %672 = vmatpush1.msra.mxu0 %v632
  %673 = vmatprep.subr.mxu0 0.0
  %674 = vmatpush1.msra.mxu0 %v631
  %675 = vmatprep.subr.mxu0 0.0
  %676 = vmatpush1.msra.mxu0 %v630
  %677 = vmatprep.subr.mxu0 0.0
  %678 = vmatpush2.msra.mxu0 0.0
  %679 = vmatprep.subr.mxu0 0.0
  %680 = vmatpush2.msra.mxu0 0.0
  %681 = vmatprep.subr.mxu0 0.0
  %682 = vmatpush2.msra.mxu0 0.0
  %683 = vmatprep.subr.mxu0 0.0
  %684 = vmatpush2.msra.mxu0 0.0
  %685 = vmatprep.subr.mxu0 0.0
  %686 = vmatpush2.msra.mxu0 0.0
  %687 = vmatprep.subr.mxu0 0.0
  %688 = vmatpush2.msra.mxu0 0.0
  %689 = vmatprep.subr.mxu0 0.0
  %690 = vmatpush2.msra.mxu0 0.0
  %691 = vmatprep.subr.mxu0 0.0
  %692 = vmatpush2.msra.mxu0 0.0
  %693 = vmatprep.subr.mxu0 0.0
  %694 = vmatpush2.msra.mxu0 0.0
  %695 = vmatprep.subr.mxu0 0.0
  %696 = vmatpush2.msra.mxu0 0.0
  %697 = vmatprep.subr.mxu0 0.0
  %698 = vmatpush2.msra.mxu0 0.0
  %699 = vmatprep.subr.mxu0 0.0
  %700 = vmatpush2.msra.mxu0 0.0
  %701 = vmatprep.subr.mxu0 0.0
  %702 = vmatpush2.msra.mxu0 0.0
  %703 = vmatprep.subr.mxu0 0.0
  %704 = vmatpush2.msra.mxu0 0.0
  %705 = vmatprep.subr.mxu0 0.0
  %706 = vmatpush2.msra.mxu0 0.0
  %707 = vmatprep.subr.mxu0 0.0
  %708 = vmatpush2.msra.mxu0 0.0
  %709 = vmatprep.mubr.f32.mxu0 0.0
  %710 = vmatmul.mubr.f32.gmra.mxu0 %v643
  %v711 = vpop.f32.mrf.mxu0
  %v712 = vadd.f32 %v639, %v711
  %v713 = vpop.f32.mrf.mxu0
  %714 = vdwg.mxu0
  %v716 = vrot.slane %v712, 4
  %v718 = vmax.f32 %v712, %v716
  %v719 = vsub.f32 %v712, %v718
  %v720 = vmul.f32 %v719, 1.442695
  %v721 = vpow.pop %v720
  %v723 = vrot.slane %v718, 4
  %v725 = vsub.f32 %v712, %v723
  %v726 = vmul.f32 %v725, 1.442695
  %v727 = vpow.pop %v726
  %v729 = vrot.slane %v727, 4
  %v731 = vadd.f32 %v721, %v729
  %v732 = vrcp.pop %v731
  %v733 = vmul.f32 %v721, %v732
  %v735 = vrot.slane %v732, 4
  %v737 = vmul.f32 %v727, %v735
  %v738 = vld [vmem:[%s12] sm:$0x3]
  %vm739 = vcmask 15360
  %v741 = vsel %vm739, %v733, 0
  %v744 = vsel %vm223, %v738, 0
  %746 = vmatprep.subr.mxu0 0.0
  %747 = vmatpush1.msra.mxu0 0.0
  %748 = vmatprep.subr.mxu0 0.0
  %749 = vmatpush1.msra.mxu0 0.0
  %750 = vmatprep.subr.mxu0 0.0
  %751 = vmatpush1.msra.mxu0 0.0
  %752 = vmatprep.subr.mxu0 0.0
  %753 = vmatpush1.msra.mxu0 0.0
  %754 = vmatprep.subr.mxu0 0.0
  %755 = vmatpush1.msra.mxu0 0.0
  %756 = vmatprep.subr.mxu0 0.0
  %757 = vmatpush1.msra.mxu0 0.0
  %758 = vmatprep.subr.mxu0 0.0
  %759 = vmatpush1.msra.mxu0 0.0
  %760 = vmatprep.subr.mxu0 0.0
  %761 = vmatpush1.msra.mxu0 0.0
  %762 = vmatprep.subr.mxu0 0.0
  %763 = vmatpush1.msra.mxu0 0.0
  %764 = vmatprep.subr.mxu0 0.0
  %765 = vmatpush1.msra.mxu0 0.0
  %766 = vmatprep.subr.mxu0 0.0
  %767 = vmatpush1.msra.mxu0 0.0
  %768 = vmatprep.subr.mxu0 0.0
  %769 = vmatpush1.msra.mxu0 0.0
  %770 = vmatprep.subr.mxu0 0.0
  %771 = vmatpush1.msra.mxu0 0.0
  %772 = vmatprep.subr.mxu0 0.0
  %773 = vmatpush1.msra.mxu0 0.0
  %774 = vmatprep.subr.mxu0 0.0
  %775 = vmatpush1.msra.mxu0 0.0
  %776 = vmatprep.subr.mxu0 0.0
  %777 = vmatpush1.msra.mxu0 %v744
  %778 = vmatprep.subr.mxu0 0.0
  %779 = vmatpush2.msra.mxu0 0.0
  %780 = vmatprep.subr.mxu0 0.0
  %781 = vmatpush2.msra.mxu0 0.0
  %782 = vmatprep.subr.mxu0 0.0
  %783 = vmatpush2.msra.mxu0 0.0
  %784 = vmatprep.subr.mxu0 0.0
  %785 = vmatpush2.msra.mxu0 0.0
  %786 = vmatprep.subr.mxu0 0.0
  %787 = vmatpush2.msra.mxu0 0.0
  %788 = vmatprep.subr.mxu0 0.0
  %789 = vmatpush2.msra.mxu0 0.0
  %790 = vmatprep.subr.mxu0 0.0
  %791 = vmatpush2.msra.mxu0 0.0
  %792 = vmatprep.subr.mxu0 0.0
  %793 = vmatpush2.msra.mxu0 0.0
  %794 = vmatprep.subr.mxu0 0.0
  %795 = vmatpush2.msra.mxu0 0.0
  %796 = vmatprep.subr.mxu0 0.0
  %797 = vmatpush2.msra.mxu0 0.0
  %798 = vmatprep.subr.mxu0 0.0
  %799 = vmatpush2.msra.mxu0 0.0
  %800 = vmatprep.subr.mxu0 0.0
  %801 = vmatpush2.msra.mxu0 0.0
  %802 = vmatprep.subr.mxu0 0.0
  %803 = vmatpush2.msra.mxu0 0.0
  %804 = vmatprep.subr.mxu0 0.0
  %805 = vmatpush2.msra.mxu0 0.0
  %806 = vmatprep.subr.mxu0 0.0
  %807 = vmatpush2.msra.mxu0 0.0
  %808 = vmatprep.subr.mxu0 0.0
  %809 = vmatpush2.msra.mxu0 0.0
  %810 = vmatprep.mubr.f32.mxu0 0.0
  %811 = vmatmul.mubr.f32.gmra.mxu0 %v741
  %v812 = vpop.f32.mrf.mxu0
  %v813 = vadd.f32 0.0, %v812
  %v814 = vpop.f32.mrf.mxu0
  %815 = vdwg.mxu0
  %v816 = vmul.f32 %v314, %v813
  %v818 = vrot.slane %v737, 4
  %v819 = vsel %vm739, %v818, 0
  %821 = vmatprep.subr.mxu0 0.0
  %822 = vmatpush1.msra.mxu0 0.0
  %823 = vmatprep.subr.mxu0 0.0
  %824 = vmatpush1.msra.mxu0 0.0
  %825 = vmatprep.subr.mxu0 0.0
  %826 = vmatpush1.msra.mxu0 0.0
  %827 = vmatprep.subr.mxu0 0.0
  %828 = vmatpush1.msra.mxu0 0.0
  %829 = vmatprep.subr.mxu0 0.0
  %830 = vmatpush1.msra.mxu0 0.0
  %831 = vmatprep.subr.mxu0 0.0
  %832 = vmatpush1.msra.mxu0 0.0
  %833 = vmatprep.subr.mxu0 0.0
  %834 = vmatpush1.msra.mxu0 0.0
  %835 = vmatprep.subr.mxu0 0.0
  %836 = vmatpush1.msra.mxu0 0.0
  %837 = vmatprep.subr.mxu0 0.0
  %838 = vmatpush1.msra.mxu0 0.0
  %839 = vmatprep.subr.mxu0 0.0
  %840 = vmatpush1.msra.mxu0 0.0
  %841 = vmatprep.subr.mxu0 0.0
  %842 = vmatpush1.msra.mxu0 0.0
  %843 = vmatprep.subr.mxu0 0.0
  %844 = vmatpush1.msra.mxu0 0.0
  %845 = vmatprep.subr.mxu0 0.0
  %846 = vmatpush1.msra.mxu0 0.0
  %847 = vmatprep.subr.mxu0 0.0
  %848 = vmatpush1.msra.mxu0 0.0
  %849 = vmatprep.subr.mxu0 0.0
  %850 = vmatpush1.msra.mxu0 0.0
  %851 = vmatprep.subr.mxu0 0.0
  %852 = vmatpush1.msra.mxu0 %v744
  %853 = vmatprep.subr.mxu0 0.0
  %854 = vmatpush2.msra.mxu0 0.0
  %855 = vmatprep.subr.mxu0 0.0
  %856 = vmatpush2.msra.mxu0 0.0
  %857 = vmatprep.subr.mxu0 0.0
  %858 = vmatpush2.msra.mxu0 0.0
  %859 = vmatprep.subr.mxu0 0.0
  %860 = vmatpush2.msra.mxu0 0.0
  %861 = vmatprep.subr.mxu0 0.0
  %862 = vmatpush2.msra.mxu0 0.0
  %863 = vmatprep.subr.mxu0 0.0
  %864 = vmatpush2.msra.mxu0 0.0
  %865 = vmatprep.subr.mxu0 0.0
  %866 = vmatpush2.msra.mxu0 0.0
  %867 = vmatprep.subr.mxu0 0.0
  %868 = vmatpush2.msra.mxu0 0.0
  %869 = vmatprep.subr.mxu0 0.0
  %870 = vmatpush2.msra.mxu0 0.0
  %871 = vmatprep.subr.mxu0 0.0
  %872 = vmatpush2.msra.mxu0 0.0
  %873 = vmatprep.subr.mxu0 0.0
  %874 = vmatpush2.msra.mxu0 0.0
  %875 = vmatprep.subr.mxu0 0.0
  %876 = vmatpush2.msra.mxu0 0.0
  %877 = vmatprep.subr.mxu0 0.0
  %878 = vmatpush2.msra.mxu0 0.0
  %879 = vmatprep.subr.mxu0 0.0
  %880 = vmatpush2.msra.mxu0 0.0
  %881 = vmatprep.subr.mxu0 0.0
  %882 = vmatpush2.msra.mxu0 0.0
  %883 = vmatprep.subr.mxu0 0.0
  %884 = vmatpush2.msra.mxu0 0.0
  %885 = vmatprep.mubr.f32.mxu0 0.0
  %886 = vmatmul.mubr.f32.gmra.mxu0 %v819
  %v887 = vpop.f32.mrf.mxu0
  %v888 = vadd.f32 0.0, %v887
  %v889 = vpop.f32.mrf.mxu0
  %890 = vdwg.mxu0
  %v891 = vmul.f32 %v413, %v888
  %v892 = vadd.f32 %v816, %v891
  %v893 = vld [vmem:[%s9] sm:$0xff]
  %v894 = vld [vmem:[%s9 + $0x8] sm:$0xff]
  %v895 = vld [vmem:[%s10] sm:$0xff]
  %v896 = vld [vmem:[%s10 + $0x8] sm:$0xff]
  %898 = vset.pattern.permute.xlu0 0
  %899 = vperm.xlu0 %898, %v895
  %v900 = vpop.permute.xlu0 %899
  %903 = vset.pattern.permute.xlu0 0
  %904 = vperm.xlu0 %903, %v896
  %v905 = vpop.permute.xlu0 %904
  %v908 = vsel %vm529, %v893, 0
  %v911 = vsel %vm529, %v894, 0
  %v914 = vsel %vm225, %v892, 0
  %916 = vmatprep.subr.mxu0 0.0
  %917 = vmatpush1.msra.mxu0 0.0
  %918 = vmatprep.subr.mxu0 0.0
  %919 = vmatpush1.msra.mxu0 0.0
  %920 = vmatprep.subr.mxu0 0.0
  %921 = vmatpush1.msra.mxu0 0.0
  %922 = vmatprep.subr.mxu0 0.0
  %923 = vmatpush1.msra.mxu0 0.0
  %924 = vmatprep.subr.mxu0 0.0
  %925 = vmatpush1.msra.mxu0 0.0
  %926 = vmatprep.subr.mxu0 0.0
  %927 = vmatpush1.msra.mxu0 0.0
  %928 = vmatprep.subr.mxu0 0.0
  %929 = vmatpush1.msra.mxu0 0.0
  %930 = vmatprep.subr.mxu0 0.0
  %931 = vmatpush1.msra.mxu0 0.0
  %932 = vmatprep.subr.mxu0 0.0
  %933 = vmatpush1.msra.mxu0 0.0
  %934 = vmatprep.subr.mxu0 0.0
  %935 = vmatpush1.msra.mxu0 0.0
  %936 = vmatprep.subr.mxu0 0.0
  %937 = vmatpush1.msra.mxu0 0.0
  %938 = vmatprep.subr.mxu0 0.0
  %939 = vmatpush1.msra.mxu0 0.0
  %940 = vmatprep.subr.mxu0 0.0
  %941 = vmatpush1.msra.mxu0 0.0
  %942 = vmatprep.subr.mxu0 0.0
  %943 = vmatpush1.msra.mxu0 0.0
  %944 = vmatprep.subr.mxu0 0.0
  %945 = vmatpush1.msra.mxu0 0.0
  %946 = vmatprep.subr.mxu0 0.0
  %947 = vmatpush1.msra.mxu0 %v914
  %948 = vmatprep.subr.mxu0 0.0
  %949 = vmatpush2.msra.mxu0 0.0
  %950 = vmatprep.subr.mxu0 0.0
  %951 = vmatpush2.msra.mxu0 0.0
  %952 = vmatprep.subr.mxu0 0.0
  %953 = vmatpush2.msra.mxu0 0.0
  %954 = vmatprep.subr.mxu0 0.0
  %955 = vmatpush2.msra.mxu0 0.0
  %956 = vmatprep.subr.mxu0 0.0
  %957 = vmatpush2.msra.mxu0 0.0
  %958 = vmatprep.subr.mxu0 0.0
  %959 = vmatpush2.msra.mxu0 0.0
  %960 = vmatprep.subr.mxu0 0.0
  %961 = vmatpush2.msra.mxu0 0.0
  %962 = vmatprep.subr.mxu0 0.0
  %963 = vmatpush2.msra.mxu0 0.0
  %964 = vmatprep.subr.mxu0 0.0
  %965 = vmatpush2.msra.mxu0 0.0
  %966 = vmatprep.subr.mxu0 0.0
  %967 = vmatpush2.msra.mxu0 0.0
  %968 = vmatprep.subr.mxu0 0.0
  %969 = vmatpush2.msra.mxu0 0.0
  %970 = vmatprep.subr.mxu0 0.0
  %971 = vmatpush2.msra.mxu0 0.0
  %972 = vmatprep.subr.mxu0 0.0
  %973 = vmatpush2.msra.mxu0 0.0
  %974 = vmatprep.subr.mxu0 0.0
  %975 = vmatpush2.msra.mxu0 0.0
  %976 = vmatprep.subr.mxu0 0.0
  %977 = vmatpush2.msra.mxu0 0.0
  %978 = vmatprep.subr.mxu0 0.0
  %979 = vmatpush2.msra.mxu0 0.0
  %980 = vmatprep.mubr.f32.mxu0 0.0
  %981 = vmatmul.mubr.f32.gmra.mxu0 %v908
  %v982 = vpop.f32.mrf.mxu0
  %v983 = vadd.f32 %v900, %v982
  %v984 = vpop.f32.mrf.mxu0
  %985 = vmatprep.mubr.f32.mxu0 0.0
  %986 = vmatmul.mubr.f32.gmra.mxu0 %v911
  %v987 = vpop.f32.mrf.mxu0
  %v988 = vadd.f32 %v905, %v987
  %v989 = vpop.f32.mrf.mxu0
  %990 = vdwg.mxu0
  %v991 = vadd.f32 %v983, %v47
  %v992 = vadd.f32 %v988, %v48
  %v993 = vmax.f32 %v991, 0.0
  %v994 = vmax.f32 %v992, 0.0
  %995 = vst [vmem:[%s14] sm:$0xff] %v993
  %996 = vst [vmem:[%s14 + $0x8] sm:$0xff] %v994
  // Predicated region
  $region58: #{pallas_forward.1} parent=0 // pred_check
    _
  $region59: #{pallas_forward.1} parent=0 // pred_check_branch
    %998 = sbr.rel (0) target = $region61
  $region60: #{pallas_forward.1} parent=0 // pred_region
    _
  $region61: #{pallas_forward.1} parent=0 // pred_fallthru
    _
  // Predicated region
  $region62: #{pallas_forward.1} parent=0 // pred_check
    _
  $region63: #{pallas_forward.1} parent=0 // pred_check_branch
    %1000 = sbr.rel (0) target = $region65
  $region64: #{pallas_forward.1} parent=0 // pred_region
    _
  $region65: #{pallas_forward.1} parent=0 // pred_fallthru
    _

</llo_original>
